<compile_context>
chip_gen: v7x
topology: tpu7x:2x2x1
jax: 0.10.0
libtpu: 0.0.40
codegen_flags: <defaults>
</compile_context>

<pallas_src>
import functools

import jax
import jax.numpy as jnp
from jax.experimental import pallas as pl
from jax.experimental.pallas import tpu as pltpu


def _round_up(x, m):
    return (x + m - 1) // m * m


def _vmem_capacity_bytes():
    try:
        return int(pltpu.get_tpu_info().vmem_capacity_bytes)
    except Exception:
        return 64 * 1024 * 1024  # conservative: v7x per-TensorCore VMEM


_VMEM_CAP = _vmem_capacity_bytes()
# ~100 MiB scoped limit on the 128-MiB parts (v5e/v6e), 48 MiB on 64-MiB v7x.
_VMEM_LIMIT = (100 * 1024 * 1024) if _VMEM_CAP >= (128 * 1024 * 1024) else (48 * 1024 * 1024)


# ----------------------------------------------------------------------------
# Fused kernel:  QK^T -> softmax -> @V  for one (batch, query-tile) grid cell
# ----------------------------------------------------------------------------
def _attn_kernel(*refs, use_mask, return_attn):
    # Refs per grid cell:
    #   q_ref    : (1, tq,  Dp)   input dtype (bf16 if wrapper padded)
    #   v_ref    : (1, Lvp, Dp)   input dtype
    #   mask_ref : (1, Lvp)  f32  (only when use_mask: 0 real key, -1e30 pad)
    #   ctx_ref  : (1, tq,  Dp)   out dtype
    #   attn_ref : (1, tq,  Lvp)  out dtype (only when return_attn)
    if use_mask:
        q_ref, v_ref, mask_ref = refs[0], refs[1], refs[2]
        out_refs = refs[3:]
    else:
        q_ref, v_ref = refs[0], refs[1]
        mask_ref = None
        out_refs = refs[2:]
    if return_attn:
        ctx_ref, attn_ref = out_refs
    else:
        (ctx_ref,) = out_refs

    q = q_ref[0].astype(jnp.bfloat16)            # (tq, Dp)
    v = v_ref[0].astype(jnp.bfloat16)            # (Lvp, Dp)

    # score = q @ v^T, contracting the last dims directly (no transpose).
    s = jax.lax.dot_general(
        q, v, dimension_numbers=(((1,), (1,)), ((), ())),
        preferred_element_type=jnp.float32)      # (tq, Lvp) f32
    if use_mask:
        s = s + mask_ref[...]                    # exclude padded keys

    # Numerically-stable softmax pieces (f32).
    m = jnp.max(s, axis=-1, keepdims=True)
    p = jnp.exp(s - m)                           # un-normalized probabilities
    denom = jnp.sum(p, axis=-1, keepdims=True)
    inv = 1.0 / denom                            # exact; (tq, 1) only -> cheap

    if return_attn:
        attn_ref[0] = (p * inv).astype(attn_ref.dtype)

    # context = softmax(s) @ v == (p @ v) * inv: scale the small (tq, Dp) tile
    # instead of normalizing the big (tq, Lvp) tile.
    ctx = jnp.dot(p.astype(jnp.bfloat16), v, preferred_element_type=jnp.float32)
    ctx_ref[0] = (ctx * inv).astype(ctx_ref.dtype)


# ----------------------------------------------------------------------------
# Wrapper: alignment-aware padding, tile selection, BlockSpecs, un-padding
# ----------------------------------------------------------------------------
@functools.partial(jax.jit, static_argnames=("tile_q", "return_attn"))
def dot_product_attention(query, value, *, tile_q=256, return_attn=True):
    """query: (B, Lq, D), value: (B, Lv, D).

    Returns (context (B, Lq, D), attn (B, Lq, Lv)) when return_attn=True,
    otherwise just context. Outputs are in query.dtype.
    """
    b, lq, d = query.shape
    bv, lv, dv = value.shape
    assert b == bv and d == dv, (query.shape, value.shape)
    out_dtype = query.dtype
    out_bytes = jnp.dtype(out_dtype).itemsize
    in_bytes = max(2, jnp.dtype(query.dtype).itemsize)  # conservative estimate

    # Lane-dense (128) last dims, sublane-aligned (8) query rows.
    dp = _round_up(d, 128)
    lvp = _round_up(lv, 128)

    # Query tile: 256 default (fills v6e/v7x 256-wide MXUs), clamped to the
    # 8-aligned query length, then shrunk until the estimated per-step VMEM
    # residency fits the generation's limit.
    tq = min(_round_up(tile_q, 8), _round_up(lq, 8))

    def est_vmem(t):
        e = 2 * t * dp * in_bytes            # Q blocks (double-buffered)
        e += 2 * lvp * dp * in_bytes         # V blocks
        e += 2 * lvp * 4                     # mask (worst case)
        e += 2 * t * dp * out_bytes          # ctx output blocks
        if return_attn:
            e += 2 * t * lvp * out_bytes     # attn output blocks
        e += 2 * t * lvp * 4                 # f32 score / p temporaries
        return e

    while tq > 8 and est_vmem(tq) > _VMEM_LIMIT:
        tq = max(8, _round_up(tq // 2, 8))

    lqp = _round_up(lq, tq)

    pad_q = (dp != d) or (lqp != lq)
    pad_v = (dp != d) or (lvp != lv)
    use_mask = lvp != lv

    if pad_q:
        qk = jnp.zeros((b, lqp, dp), jnp.bfloat16)
        qk = qk.at[:, :lq, :d].set(query.astype(jnp.bfloat16))
    else:
        qk = query   # aligned: read once, cast to bf16 inside the kernel
    if pad_v:
        vk = jnp.zeros((b, lvp, dp), jnp.bfloat16)
        vk = vk.at[:, :lv, :d].set(value.astype(jnp.bfloat16))
    else:
        vk = value

    inputs = [qk, vk]
    in_specs = [
        pl.BlockSpec((1, tq, dp), lambda bi, qi: (bi, qi, 0)),
        pl.BlockSpec((1, lvp, dp), lambda bi, qi: (bi, 0, 0)),
    ]
    if use_mask:
        mask = jnp.where(jnp.arange(lvp) < lv, 0.0, -1e30).astype(jnp.float32)
        inputs.append(mask.reshape(1, lvp))
        in_specs.append(pl.BlockSpec((1, lvp), lambda bi, qi: (0, 0)))

    ctx_shape = jax.ShapeDtypeStruct((b, lqp, dp), out_dtype)
    ctx_spec = pl.BlockSpec((1, tq, dp), lambda bi, qi: (bi, qi, 0))
    if return_attn:
        out_shape = (ctx_shape, jax.ShapeDtypeStruct((b, lqp, lvp), out_dtype))
        out_specs = (ctx_spec,
                     pl.BlockSpec((1, tq, lvp), lambda bi, qi: (bi, qi, 0)))
    else:
        out_shape = ctx_shape
        out_specs = ctx_spec

    kernel = functools.partial(_attn_kernel, use_mask=use_mask,
                               return_attn=return_attn)
    out = pl.pallas_call(
        kernel,
        out_shape=out_shape,
        grid=(b, lqp // tq),
        in_specs=in_specs,
        out_specs=out_specs,
        compiler_params=pltpu.CompilerParams(
            # Both axes are independent -> megacore / dual-TC sharding.
            dimension_semantics=("parallel", "parallel"),
            vmem_limit_bytes=_VMEM_LIMIT,
        ),
    )(*inputs)

    if return_attn:
        ctx_p, attn_p = out
        return ctx_p[:, :lq, :d], attn_p[:, :lq, :lv]
    return out[:, :lq, :d]


# ----------------------------------------------------------------------------
# Self-test against a pure-JAX f32 reference
# ----------------------------------------------------------------------------
if __name__ == "__main__":
    key = jax.random.PRNGKey(0)
    kq, kv = jax.random.split(key)

    # Shapes implied by the module: query (B, Lq, D), value (B, Lv, D).
    batch, seq_q, seq_v, hidden = 2, 8, 16, 32
    query = jax.random.normal(kq, (batch, seq_q, hidden), jnp.float32)
    value = jax.random.normal(kv, (batch, seq_v, hidden), jnp.float32)

    context, attn = dot_product_attention(query, value)
    jax.block_until_ready((context, attn))

    # Shape / sanity checks.
    assert context.shape == (batch, seq_q, hidden), context.shape
    assert attn.shape == (batch, seq_q, seq_v), attn.shape
    assert bool(jnp.all(jnp.isfinite(context)))
    assert bool(jnp.all(jnp.isfinite(attn)))

    # Softmax rows sum to ~1 (exact divide in-kernel; f32 rounding only).
    row_sums = jnp.sum(attn, axis=-1)
    assert bool(jnp.all(jnp.abs(row_sums - 1.0) < 1e-3)), row_sums

    # Agreement with the f32 reference (bf16 MXU inputs -> loose tolerance).
    score = jnp.einsum("bqd,bkd->bqk", query, value)
    attn_ref = jax.nn.softmax(score, axis=-1)
    ctx_ref = jnp.einsum("bqk,bkd->bqd", attn_ref, value)
    assert bool(jnp.all(jnp.abs(context - ctx_ref) < 1e-1))
    assert bool(jnp.all(jnp.abs(attn - attn_ref) < 1e-1))

    # Context-only fast path (no attn HBM writeback) agrees with full path.
    ctx_only = dot_product_attention(query, value, return_attn=False)
    jax.block_until_ready(ctx_only)
    assert bool(jnp.all(jnp.abs(ctx_only - context) < 1e-3))

    print("KERNEL_OK")
</pallas_src>

<mosaic_0001>
module attributes {stable_mosaic.version = 11 : i64} {
  func.func @_attn_kernel(%arg0: i32, %arg1: i32, %arg2: memref<1x8x128xbf16, #tpu.memory_space<vmem>>, %arg3: memref<1x128x128xbf16, #tpu.memory_space<vmem>>, %arg4: memref<1x128xf32, #tpu.memory_space<vmem>>, %arg5: memref<1x8x128xf32, #tpu.memory_space<vmem>>, %arg6: memref<1x8x128xf32, #tpu.memory_space<vmem>>) attributes {dimension_semantics = [#tpu.dimension_semantics<parallel>, #tpu.dimension_semantics<parallel>], iteration_bounds = array<i64: 2, 1>, scalar_prefetch = 0 : i64, scratch_operands = 0 : i64, tpu.core_type = #tpu.core_type<tc>, window_params = [{transform_indices = @transform_0, window_bounds = array<i64: 1, 8, 128>}, {transform_indices = @transform_1, window_bounds = array<i64: 1, 128, 128>}, {pipeline_mode = #tpu.pipeline_mode<synchronous>, transform_indices = @transform_2, window_bounds = array<i64: 1, 128>}, {transform_indices = @transform_3, window_bounds = array<i64: 1, 8, 128>}, {transform_indices = @transform_4, window_bounds = array<i64: 1, 8, 128>}]} {
    %c0 = arith.constant 0 : index
    %c0_0 = arith.constant 0 : index
    %c0_1 = arith.constant 0 : index
    %0 = vector.load %arg2[%c0, %c0_0, %c0_1] : memref<1x8x128xbf16, #tpu.memory_space<vmem>>, vector<1x8x128xbf16>
    %1 = vector.shape_cast %0 : vector<1x8x128xbf16> to vector<8x128xbf16>
    %c0_2 = arith.constant 0 : index
    %c0_3 = arith.constant 0 : index
    %c0_4 = arith.constant 0 : index
    %2 = vector.load %arg3[%c0_2, %c0_3, %c0_4] : memref<1x128x128xbf16, #tpu.memory_space<vmem>>, vector<1x128x128xbf16>
    %3 = vector.shape_cast %2 : vector<1x128x128xbf16> to vector<128x128xbf16>
    %cst = arith.constant dense<0.000000e+00> : vector<8x128xf32>
    %4 = tpu.matmul %1, %3, %cst {dimension_numbers = #tpu.dot_dimension_numbers<[1], [1], [0], [0], [0, 0, 1, 0], [], []>} : vector<8x128xbf16>, vector<128x128xbf16>, vector<8x128xf32> -> vector<8x128xf32>
    %c0_5 = arith.constant 0 : index
    %c0_6 = arith.constant 0 : index
    %5 = vector.load %arg4[%c0_5, %c0_6] : memref<1x128xf32, #tpu.memory_space<vmem>>, vector<1x128xf32>
    %6 = vector.broadcast %5 : vector<1x128xf32> to vector<8x128xf32>
    %7 = arith.addf %4, %6 : vector<8x128xf32>
    %cst_7 = arith.constant dense<0xFF800000> : vector<8xf32>
    %8 = vector.multi_reduction <maximumf>, %7, %cst_7 [1] : vector<8x128xf32> to vector<8xf32>
    %9 = vector.shape_cast %8 : vector<8xf32> to vector<8x1xf32>
    %10 = vector.broadcast %9 : vector<8x1xf32> to vector<8x128xf32>
    %11 = arith.subf %7, %10 : vector<8x128xf32>
    %12 = math.exp %11 : vector<8x128xf32>
    %cst_8 = arith.constant dense<0.000000e+00> : vector<8xf32>
    %13 = vector.multi_reduction <add>, %12, %cst_8 [1] : vector<8x128xf32> to vector<8xf32>
    %14 = vector.shape_cast %13 : vector<8xf32> to vector<8x1xf32>
    %cst_9 = arith.constant 1.000000e+00 : f32
    %15 = vector.broadcast %cst_9 : f32 to vector<8x1xf32>
    %16 = arith.divf %15, %14 : vector<8x1xf32>
    %17 = vector.broadcast %16 : vector<8x1xf32> to vector<8x128xf32>
    %18 = arith.mulf %12, %17 : vector<8x128xf32>
    %c0_10 = arith.constant 0 : index
    %c0_11 = arith.constant 0 : index
    %c0_12 = arith.constant 0 : index
    %19 = vector.load %arg6[%c0_10, %c0_11, %c0_12] : memref<1x8x128xf32, #tpu.memory_space<vmem>>, vector<1x8x128xf32>
    %20 = vector.shape_cast %19 : vector<1x8x128xf32> to vector<8x128xf32>
    %21 = vector.shape_cast %18 : vector<8x128xf32> to vector<1x8x128xf32>
    tpu.vector_store %arg6[%c0_10, %c0_11, %c0_12], %21 {strides = array<i32>} : memref<1x8x128xf32, #tpu.memory_space<vmem>>, vector<1x8x128xf32>,
    %22 = arith.truncf %12 : vector<8x128xf32> to vector<8x128xbf16>
    %cst_13 = arith.constant dense<0.000000e+00> : vector<8x128xf32>
    %23 = tpu.matmul %22, %3, %cst_13 {dimension_numbers = #tpu.dot_dimension_numbers<[1], [0], [0], [1], [0, 0, 1, 1], [], []>} : vector<8x128xbf16>, vector<128x128xbf16>, vector<8x128xf32> -> vector<8x128xf32>
    %24 = vector.broadcast %16 : vector<8x1xf32> to vector<8x128xf32>
    %25 = arith.mulf %23, %24 : vector<8x128xf32>
    %c0_14 = arith.constant 0 : index
    %c0_15 = arith.constant 0 : index
    %c0_16 = arith.constant 0 : index
    %26 = vector.load %arg5[%c0_14, %c0_15, %c0_16] : memref<1x8x128xf32, #tpu.memory_space<vmem>>, vector<1x8x128xf32>
    %27 = vector.shape_cast %26 : vector<1x8x128xf32> to vector<8x128xf32>
    %28 = vector.shape_cast %25 : vector<8x128xf32> to vector<1x8x128xf32>
    tpu.vector_store %arg5[%c0_14, %c0_15, %c0_16], %28 {strides = array<i32>} : memref<1x8x128xf32, #tpu.memory_space<vmem>>, vector<1x8x128xf32>,
    return
  }
  func.func @transform_0(%arg0: i32, %arg1: i32) -> (i32, i32, i32) {
    %c0_i32 = arith.constant 0 : i32
    %c0_i32_0 = arith.constant 0 : i32
    return %arg0, %arg1, %c0_i32 : i32, i32, i32
  }
  func.func @transform_1(%arg0: i32, %arg1: i32) -> (i32, i32, i32) {
    %c0_i32 = arith.constant 0 : i32
    %c0_i32_0 = arith.constant 0 : i32
    %c0_i32_1 = arith.constant 0 : i32
    return %arg0, %c0_i32, %c0_i32_0 : i32, i32, i32
  }
  func.func @transform_2(%arg0: i32, %arg1: i32) -> (i32, i32) {
    %c0_i32 = arith.constant 0 : i32
    %c0_i32_0 = arith.constant 0 : i32
    %c0_i32_1 = arith.constant 0 : i32
    return %c0_i32, %c0_i32_0 : i32, i32
  }
  func.func @transform_3(%arg0: i32, %arg1: i32) -> (i32, i32, i32) {
    %c0_i32 = arith.constant 0 : i32
    %c0_i32_0 = arith.constant 0 : i32
    return %arg0, %arg1, %c0_i32 : i32, i32, i32
  }
  func.func @transform_4(%arg0: i32, %arg1: i32) -> (i32, i32, i32) {
    %c0_i32 = arith.constant 0 : i32
    %c0_i32_0 = arith.constant 0 : i32
    return %arg0, %arg1, %c0_i32 : i32, i32, i32
  }
}

</mosaic_0001>

<llo_original>
// kernel: dot_product_attention.1
$region0: #{dot_product_attention.1}
  #allocation0 [shape = 'u32[]', space=smem, size = 0x4, offset = 0x4, fixed_abs, tag = 'smem constant byte address 0x4 - core index']
  #allocation1 [shape = 'u32[144,128]{1,0:T(1,128)}', space=vmem, size = 0x12000, scoped, tag = 'internal scratch']
  %s0 = inlined_call_operand.vmem [shape: bf16[2,8,128], index: 0, kind: input, shape index: {}]
  %s1 = inlined_call_operand.vmem [shape: bf16[2,128,128], index: 1, kind: input, shape index: {}]
  %s2 = inlined_call_operand.vmem [shape: f32[1,128], index: 2, kind: input, shape index: {}]
  %s3 = inlined_call_operand.hbm [shape: f32[2,8,128], index: 3, kind: output, shape index: {0}]
  %s4 = inlined_call_operand.hbm [shape: f32[2,8,128], index: 4, kind: output, shape index: {1}]
  %5 = xla_tuple %s3, %s4
  %s6 = sld [smem:[#allocation0]]
  $region53: #{dot_product_attention.1} parent=0
    _
  %s8 = ssub.s32 1, %s6
  %s9 = scalar_select 0, %s8, %s6
  $region1: #{dot_product_attention.1} parent=0
    #allocation2 [shape = 'u8[8192]{0}', space=vmem, size = 0x2000, scoped, tag = 'output window, operand 0']
    #allocation3 [shape = 's32[2]{0}', space=sflag, size = 0x8, scoped, tag = 'scoped memory for dot_product_attention.1']
    #allocation4 [shape = 'u8[8192]{0}', space=vmem, size = 0x2000, scoped, tag = 'output window, operand 1']
    #allocation5 [shape = 's32[2]{0}', space=sflag, size = 0x8, scoped, tag = 'scoped memory for dot_product_attention.1']
    %10 = vsyncpa [#allocation3], 0
    %s11 = scalar_lea.sflag [#allocation3], 1
    %12 = vsyncpa %s11, 0
    %13 = vsyncpa [#allocation5], 0
    %s14 = scalar_lea.sflag [#allocation5], 1
    %15 = vsyncpa %s14, 0
    loop: start=0, step=1, limit=4
    $region2: #{dot_product_attention.1} parent=1 // loop_pre_header
      _
    $region3: #{dot_product_attention.1} parent=1 // loop_header
      %s17 = sphi 0, %s21
      %p18 = scmp.ge.s32.totalorder %s17, 4
      %s24 = sphi 0, %s36
      %s25 = sphi 0, %s32
      %s26 = sphi 0, %s24
      %s27 = sphi 0, %s25
      %s28 = sphi 0, %s26
      %s29 = sphi 0, %s27
      %s41 = sphi 0, %s43
      %s44 = sphi 0, %s41
      %s45 = sphi 0, %s44
      %s61 = sphi 0, %s45
      %s67 = sphi 0, %s69
      %s70 = sphi 0, %s67
      %s71 = sphi 0, %s70
      %s87 = sphi 0, %s71
      %s91 = sphi 0, %s91
      %s93 = sphi 0, %s91
      %s94 = sphi 0, %s93
      %s108 = sphi 0, %s94
      %s116 = sphi 0, %s118
      %s119 = sphi 0, %s116
      %s120 = sphi 0, %s119
      %s136 = sphi 0, %s120
      %s144 = sphi 0, %s146
      %s147 = sphi 0, %s144
      %s148 = sphi 0, %s147
      %s164 = sphi 0, %s148
    $region4: #{dot_product_attention.1} parent=1 // loop_header_branch
      %20 = sbr.rel (%p18) target = $region8
    $region5: #{dot_product_attention.1} parent=1 // loop_body
      %s22 = ssub.s32 %s17, 1
      %s23 = ssub.s32 %s17, 2
      %s30 = sadd.s32 1, %s25
      %p31 = scmp.ge.s32.totalorder %s30, 1
      %s32 = scalar_select %p31, 0, %s30
      %s33 = sadd.s32 1, %s24
      %s34 = scalar_select %p31, %s33, %s24
      %p35 = scmp.ge.s32.totalorder %s34, 2
      %s36 = scalar_select %p35, 0, %s34
      %s37 = ssub.s32 %s24, %s36
      %s38 = ssub.s32 %s25, %s32
      %s39 = sor.u32 %s37, %s38
      %p40 = scmp.eq.s32.totalorder %s39, 0
      %s42 = sadd.s32 %s41, 1
      %s43 = scalar_select %p40, %s41, %s42
      %p46 = pneg %p40
      %p47 = scmp.eq.s32.totalorder %s17, 1
      %p48 = por %p46, %p47
      %p49 = scmp.ne.s32.totalorder %s41, %s44
      %p50 = scmp.eq.s32.totalorder %s17, 0
      %p51 = por %p49, %p50
      %p52 = scmp.ne.s32.totalorder %s41, %s44
      %p53 = scmp.eq.s32.totalorder %s22, 1
      %p54 = por %p52, %p53
      %p55 = scmp.ne.s32.totalorder %s44, %s45
      %p56 = scmp.eq.s32.totalorder %s22, 0
      %p57 = por %p55, %p56
      %p58 = scmp.ne.s32.totalorder %s44, %s45
      %p59 = scmp.eq.s32.totalorder %s23, 1
      %p60 = por %p58, %p59
      %p62 = scmp.ne.s32.totalorder %s45, %s61
      %p63 = scmp.eq.s32.totalorder %s23, 0
      %p64 = por %p62, %p63
      %s65 = ssub.s32 %s24, %s36
      %p66 = scmp.eq.s32.totalorder %s65, 0
      %s68 = sadd.s32 %s67, 1
      %s69 = scalar_select %p66, %s67, %s68
      %p72 = pneg %p66
      %p73 = scmp.eq.s32.totalorder %s17, 1
      %p74 = por %p72, %p73
      %p75 = scmp.ne.s32.totalorder %s67, %s70
      %p76 = scmp.eq.s32.totalorder %s17, 0
      %p77 = por %p75, %p76
      %p78 = scmp.ne.s32.totalorder %s67, %s70
      %p79 = scmp.eq.s32.totalorder %s22, 1
      %p80 = por %p78, %p79
      %p81 = scmp.ne.s32.totalorder %s70, %s71
      %p82 = scmp.eq.s32.totalorder %s22, 0
      %p83 = por %p81, %p82
      %p84 = scmp.ne.s32.totalorder %s70, %s71
      %p85 = scmp.eq.s32.totalorder %s23, 1
      %p86 = por %p84, %p85
      %p88 = scmp.ne.s32.totalorder %s71, %s87
      %p89 = scmp.eq.s32.totalorder %s23, 0
      %p90 = por %p88, %p89
      %s92 = sadd.s32 %s91, 1
      %p95 = scmp.eq.s32.totalorder %s17, 1
      %p96 = scmp.ne.s32.totalorder %s91, %s93
      %p97 = scmp.eq.s32.totalorder %s17, 0
      %p98 = por %p96, %p97
      %p99 = scmp.ne.s32.totalorder %s91, %s93
      %p100 = scmp.eq.s32.totalorder %s22, 1
      %p101 = por %p99, %p100
      %p102 = scmp.ne.s32.totalorder %s93, %s94
      %p103 = scmp.eq.s32.totalorder %s22, 0
      %p104 = por %p102, %p103
      %p105 = scmp.ne.s32.totalorder %s93, %s94
      %p106 = scmp.eq.s32.totalorder %s23, 1
      %p107 = por %p105, %p106
      %p109 = scmp.ne.s32.totalorder %s94, %s108
      %p110 = scmp.eq.s32.totalorder %s23, 0
      %p111 = por %p109, %p110
      %s112 = ssub.s32 %s24, %s36
      %s113 = ssub.s32 %s25, %s32
      %s114 = sor.u32 %s112, %s113
      %p115 = scmp.eq.s32.totalorder %s114, 0
      %s117 = sadd.s32 %s116, 1
      %s118 = scalar_select %p115, %s116, %s117
      %p121 = pneg %p115
      %p122 = scmp.eq.s32.totalorder %s17, 1
      %p123 = por %p121, %p122
      %p124 = scmp.ne.s32.totalorder %s116, %s119
      %p125 = scmp.eq.s32.totalorder %s17, 0
      %p126 = por %p124, %p125
      %p127 = scmp.ne.s32.totalorder %s116, %s119
      %p128 = scmp.eq.s32.totalorder %s22, 1
      %p129 = por %p127, %p128
      %p130 = scmp.ne.s32.totalorder %s119, %s120
      %p131 = scmp.eq.s32.totalorder %s22, 0
      %p132 = por %p130, %p131
      %p133 = scmp.ne.s32.totalorder %s119, %s120
      %p134 = scmp.eq.s32.totalorder %s23, 1
      %p135 = por %p133, %p134
      %p137 = scmp.ne.s32.totalorder %s120, %s136
      %p138 = scmp.eq.s32.totalorder %s23, 0
      %p139 = por %p137, %p138
      %s140 = ssub.s32 %s24, %s36
      %s141 = ssub.s32 %s25, %s32
      %s142 = sor.u32 %s140, %s141
      %p143 = scmp.eq.s32.totalorder %s142, 0
      %s145 = sadd.s32 %s144, 1
      %s146 = scalar_select %p143, %s144, %s145
      %p149 = pneg %p143
      %p150 = scmp.eq.s32.totalorder %s17, 1
      %p151 = por %p149, %p150
      %p152 = scmp.ne.s32.totalorder %s144, %s147
      %p153 = scmp.eq.s32.totalorder %s17, 0
      %p154 = por %p152, %p153
      %p155 = scmp.ne.s32.totalorder %s144, %s147
      %p156 = scmp.eq.s32.totalorder %s22, 1
      %p157 = por %p155, %p156
      %p158 = scmp.ne.s32.totalorder %s147, %s148
      %p159 = scmp.eq.s32.totalorder %s22, 0
      %p160 = por %p158, %p159
      %p161 = scmp.ne.s32.totalorder %s147, %s148
      %p162 = scmp.eq.s32.totalorder %s23, 1
      %p163 = por %p161, %p162
      %p165 = scmp.ne.s32.totalorder %s148, %s164
      %p166 = scmp.eq.s32.totalorder %s23, 0
      %p167 = por %p165, %p166
      %p168 = scmp.le.s32.totalorder 1, %s17
      %p169 = scmp.lt.s32.totalorder %s17, 3
      %p170 = pnand %p168, %p169
      %p171 = pneg %p170
      // Predicated region
      $region9: #{dot_product_attention.1} parent=5 // pred_check
        _
      $region10: #{dot_product_attention.1} parent=5 // pred_check_branch
        %173 = sbr.rel (%p170) target = $region12
      $region11: #{dot_product_attention.1} parent=5 // pred_region
        %s174 = ssub.s32 %s17, 1
        // Predicated region
        $region13: #{dot_product_attention.1} parent=11 // pred_check
          %p175 = pneg %p104
        $region14: #{dot_product_attention.1} parent=11 // pred_check_branch
          %177 = sbr.rel (%p175) target = $region16
        $region15: #{dot_product_attention.1} parent=11 // pred_region
          _
        $region16: #{dot_product_attention.1} parent=11 // pred_fallthru
          _
      $region12: #{dot_product_attention.1} parent=5 // pred_fallthru
        _
      %p178 = scmp.lt.s32.totalorder %s17, 2
      // Predicated region
      $region17: #{dot_product_attention.1} parent=5 // pred_check
        %p179 = pneg %p178
      $region18: #{dot_product_attention.1} parent=5 // pred_check_branch
        %181 = sbr.rel (%p179) target = $region20
      $region19: #{dot_product_attention.1} parent=5 // pred_region
        // Predicated region
        $region21: #{dot_product_attention.1} parent=19 // pred_check
          %p182 = pneg %p51
        $region22: #{dot_product_attention.1} parent=19 // pred_check_branch
          %184 = sbr.rel (%p182) target = $region24
        $region23: #{dot_product_attention.1} parent=19 // pred_region
          %p185 = scmp.lt.s32.totalorder %s24, 1
          %s186 = scalar_select %p185, %s24, 1
          %p187 = scmp.lt.s32.totalorder %s25, 0
          %s188 = scalar_select %p187, %s25, 0
          %s189 = sadd.s32 %s188, %s186
          %s190 = smul.addr %s189, 4
          %s191 = scalar_lea.vmem %s0, %s190
        $region24: #{dot_product_attention.1} parent=19 // pred_fallthru
          _
        // Predicated region
        $region25: #{dot_product_attention.1} parent=19 // pred_check
          %p192 = pneg %p77
        $region26: #{dot_product_attention.1} parent=19 // pred_check_branch
          %194 = sbr.rel (%p192) target = $region28
        $region27: #{dot_product_attention.1} parent=19 // pred_region
          %p195 = scmp.lt.s32.totalorder %s24, 1
          %s196 = scalar_select %p195, %s24, 1
          %s197 = smul.addr %s196, 16
          %s198 = smul.addr %s197, 4
          %s199 = scalar_lea.vmem %s1, %s198
        $region28: #{dot_product_attention.1} parent=19 // pred_fallthru
          _
      $region20: #{dot_product_attention.1} parent=5 // pred_fallthru
        _
      %p200 = scmp.le.s32.totalorder 1, %s17
      %p201 = scmp.lt.s32.totalorder %s17, 3
      %p202 = pnand %p200, %p201
      %p203 = pneg %p202
      // Predicated region
      $region29: #{dot_product_attention.1} parent=5 // pred_check
        _
      $region30: #{dot_product_attention.1} parent=5 // pred_check_branch
        %205 = sbr.rel (%p202) target = $region32
      $region31: #{dot_product_attention.1} parent=5 // pred_region
        %s206 = ssub.s32 %s17, 1
        %p207 = scmp.lt.s32.totalorder %s26, 1
        %s208 = scalar_select %p207, %s26, 1
        %p209 = scmp.lt.s32.totalorder %s27, 0
        %s210 = scalar_select %p209, %s27, 0
        %s211 = sadd.s32 %s210, %s208
        %s212 = smul.addr %s211, 4
        %s213 = scalar_lea.vmem %s0, %s212
        %p214 = pneg %p57
        %p215 = pneg %p54
        %p216 = scmp.lt.s32.totalorder %s26, 1
        %s217 = scalar_select %p216, %s26, 1
        %s218 = smul.addr %s217, 16
        %s219 = smul.addr %s218, 4
        %s220 = scalar_lea.vmem %s1, %s219
        %p221 = pneg %p83
        %p222 = pneg %p80
        %p223 = pneg %p104
        %p224 = pneg %p101
        %p225 = pneg %p132
        %p226 = pneg %p129
        %s227 = sand.u32 %s119, 1
        %s228 = scalar_lea.sflag [#allocation3], %s227
        %s229 = sand.u32 %s119, 1
        %s230 = smul.addr %s229, 8
        %s231 = scalar_lea.vmem [#allocation2], %s230
        %p232 = pneg %p160
        %p233 = pneg %p157
        %s234 = sand.u32 %s147, 1
        %s235 = scalar_lea.sflag [#allocation5], %s234
        %s236 = sand.u32 %s147, 1
        %s237 = smul.addr %s236, 8
        %s238 = scalar_lea.vmem [#allocation4], %s237
        %p239 = scmp.lt.s32.totalorder %s26, 1
        %s240 = scalar_select %p239, %s26, 1
        %p241 = scmp.lt.s32.totalorder %s27, 0
        %s242 = scalar_select %p241, %s27, 0
        %s243 = sadd.s32 %s242, %s240
        %s244 = smul.addr %s243, 4
        %s245 = scalar_lea.vmem %s0, %s244
        %p246 = scmp.lt.s32.totalorder %s26, 1
        %s247 = scalar_select %p246, %s26, 1
        %s248 = smul.addr %s247, 16
        %s249 = smul.addr %s248, 4
        %s250 = scalar_lea.vmem %s1, %s249
        %v252 = vld [vmem:[%s245] sm:$0xf]
        %v253 = vld [vmem:[%s250] sm:$0xf]
        %v254 = vld [vmem:[%s250 + $0x4] sm:$0xf]
        %v255 = vld [vmem:[%s250 + $0x8] sm:$0xf]
        %v256 = vld [vmem:[%s250 + $0xc] sm:$0xf]
        %v257 = vld [vmem:[%s250 + $0x10] sm:$0xf]
        %v258 = vld [vmem:[%s250 + $0x14] sm:$0xf]
        %v259 = vld [vmem:[%s250 + $0x18] sm:$0xf]
        %v260 = vld [vmem:[%s250 + $0x1c] sm:$0xf]
        %v261 = vld [vmem:[%s250 + $0x20] sm:$0xf]
        %v262 = vld [vmem:[%s250 + $0x24] sm:$0xf]
        %v263 = vld [vmem:[%s250 + $0x28] sm:$0xf]
        %v264 = vld [vmem:[%s250 + $0x2c] sm:$0xf]
        %v265 = vld [vmem:[%s250 + $0x30] sm:$0xf]
        %v266 = vld [vmem:[%s250 + $0x34] sm:$0xf]
        %v267 = vld [vmem:[%s250 + $0x38] sm:$0xf]
        %v268 = vld [vmem:[%s250 + $0x3c] sm:$0xf]
        %v269 = vld [vmem:[%s2] sm:$0x1]
        %v271 = vlaneseq
        %v272 = vshrl.u32 %v271, 7
        %v273 = vsub.s32 0, %v272
        %v274 = vrot.slane %v269, %v273
        %v292 = vunpack.c.l.b16 %v253
        %v293 = vunpack.c.l.b16 %v254
        %v294 = vunpack.c.l.b16 %v255
        %v295 = vunpack.c.l.b16 %v256
        %v296 = vunpack.c.l.b16 %v257
        %v297 = vunpack.c.l.b16 %v258
        %v298 = vunpack.c.l.b16 %v259
        %v299 = vunpack.c.l.b16 %v260
        %v300 = vunpack.c.l.b16 %v261
        %v301 = vunpack.c.l.b16 %v262
        %v302 = vunpack.c.l.b16 %v263
        %v303 = vunpack.c.l.b16 %v264
        %v304 = vunpack.c.l.b16 %v265
        %v305 = vunpack.c.l.b16 %v266
        %v306 = vunpack.c.l.b16 %v267
        %v307 = vunpack.c.l.b16 %v268
        %v308 = vpack.c.b16 %v293, %v292
        %v309 = vpack.c.b16 %v295, %v294
        %v310 = vpack.c.b16 %v297, %v296
        %v311 = vpack.c.b16 %v299, %v298
        %v312 = vpack.c.b16 %v301, %v300
        %v313 = vpack.c.b16 %v303, %v302
        %v314 = vpack.c.b16 %v305, %v304
        %v315 = vpack.c.b16 %v307, %v306
        %324 = vmatprep.subr.bf16.mxu0 0
        %325 = vmatpush1.bf16.xpose.msra.mxu0 %v308
        %326 = vmatprep.subr.bf16.mxu0 0
        %327 = vmatpush1.bf16.xpose.msra.mxu0 %v309
        %328 = vmatprep.subr.bf16.mxu0 0
        %329 = vmatpush1.bf16.xpose.msra.mxu0 %v310
        %330 = vmatprep.subr.bf16.mxu0 0
        %331 = vmatpush1.bf16.xpose.msra.mxu0 %v311
        %332 = vmatprep.subr.bf16.mxu0 0
        %333 = vmatpush1.bf16.xpose.msra.mxu0 %v312
        %334 = vmatprep.subr.bf16.mxu0 0
        %335 = vmatpush1.bf16.xpose.msra.mxu0 %v313
        %336 = vmatprep.subr.bf16.mxu0 0
        %337 = vmatpush1.bf16.xpose.msra.mxu0 %v314
        %338 = vmatprep.subr.bf16.mxu0 0
        %339 = vmatpush1.bf16.xpose.msra.mxu0 %v315
        %340 = vmatprep.subr.bf16.mxu0 0
        %341 = vmatpush1.bf16.xpose.msra.mxu0 0
        %342 = vmatprep.subr.bf16.mxu0 0
        %343 = vmatpush1.bf16.xpose.msra.mxu0 0
        %344 = vmatprep.subr.bf16.mxu0 0
        %345 = vmatpush1.bf16.xpose.msra.mxu0 0
        %346 = vmatprep.subr.bf16.mxu0 0
        %347 = vmatpush1.bf16.xpose.msra.mxu0 0
        %348 = vmatprep.subr.bf16.mxu0 0
        %349 = vmatpush1.bf16.xpose.msra.mxu0 0
        %350 = vmatprep.subr.bf16.mxu0 0
        %351 = vmatpush1.bf16.xpose.msra.mxu0 0
        %352 = vmatprep.subr.bf16.mxu0 0
        %353 = vmatpush1.bf16.xpose.msra.mxu0 0
        %354 = vmatprep.subr.bf16.mxu0 0
        %355 = vmatpush1.bf16.xpose.msra.mxu0 0
        %356 = vmatprep.mubr.bf16.mxu0 0
        %357 = vmatmul.mubr.bf16.gmra.mrb[0].mxu0 %v252
        %v358 = vpop.f32.mrb[0].mxu0
        %v359 = vadd.f32 %v274, %v358
        %v360 = vpop.f32.mrb[0].mxu0
        %v361 = vpop.f32.mrb[0].mxu0
        %v362 = vpop.f32.mrb[0].mxu0
        %363 = vdwg.mxu0
        %364 = vmax.xlane.f32.xlu0 %v359
        %v365 = vpop.xlane.xlu0 %364
        %v366 = vsub.f32 %v359, %v365
        %v367 = vmul.f32 %v366, 1.442695
        %v368 = vpow.pop %v367
        %369 = vadd.xlane.f32.xlu0 %v368
        %v370 = vpop.xlane.xlu0 %369
        %v371 = vrcp.pop %v370
        %v372 = vmul.f32 1.0, %v371
        %v373 = vmul.f32 %v368, %v372
        %374 = vst [vmem:[%s238] sm:$0xff] %v373
        %v375 = vpack.c.bf16 %v368, %v368
        %376 = vmatprep.subr.bf16.mxu0 0
        %377 = vmatpush1.bf16.msra.mxu0 %v308
        %378 = vmatprep.subr.bf16.mxu0 0
        %379 = vmatpush1.bf16.msra.mxu0 %v309
        %380 = vmatprep.subr.bf16.mxu0 0
        %381 = vmatpush1.bf16.msra.mxu0 %v310
        %382 = vmatprep.subr.bf16.mxu0 0
        %383 = vmatpush1.bf16.msra.mxu0 %v311
        %384 = vmatprep.subr.bf16.mxu0 0
        %385 = vmatpush1.bf16.msra.mxu0 %v312
        %386 = vmatprep.subr.bf16.mxu0 0
        %387 = vmatpush1.bf16.msra.mxu0 %v313
        %388 = vmatprep.subr.bf16.mxu0 0
        %389 = vmatpush1.bf16.msra.mxu0 %v314
        %390 = vmatprep.subr.bf16.mxu0 0
        %391 = vmatpush1.bf16.msra.mxu0 %v315
        %392 = vmatprep.subr.bf16.mxu0 0
        %393 = vmatpush1.bf16.msra.mxu0 0
        %394 = vmatprep.subr.bf16.mxu0 0
        %395 = vmatpush1.bf16.msra.mxu0 0
        %396 = vmatprep.subr.bf16.mxu0 0
        %397 = vmatpush1.bf16.msra.mxu0 0
        %398 = vmatprep.subr.bf16.mxu0 0
        %399 = vmatpush1.bf16.msra.mxu0 0
        %400 = vmatprep.subr.bf16.mxu0 0
        %401 = vmatpush1.bf16.msra.mxu0 0
        %402 = vmatprep.subr.bf16.mxu0 0
        %403 = vmatpush1.bf16.msra.mxu0 0
        %404 = vmatprep.subr.bf16.mxu0 0
        %405 = vmatpush1.bf16.msra.mxu0 0
        %406 = vmatprep.subr.bf16.mxu0 0
        %407 = vmatpush1.bf16.msra.mxu0 0
        %408 = vmatprep.mubr.bf16.mxu0 0
        %409 = vmatmul.mubr.bf16.gmra.mrb[0].mxu0 %v375
        %v410 = vpop.f32.mrb[0].mxu0
        %v411 = vadd.f32 0.0, %v410
        %v412 = vpop.f32.mrb[0].mxu0
        %v413 = vpop.f32.mrb[0].mxu0
        %v414 = vpop.f32.mrb[0].mxu0
        %415 = vdwg.mxu0
        %v416 = vmul.f32 %v411, %v372
        %417 = vst [vmem:[%s231] sm:$0xff] %v416
        %s418 = sand.u32 %s119, 1
        %s419 = scalar_lea.sflag [#allocation3], %s418
        %s420 = sand.u32 %s119, 1
        %s421 = smul.addr %s420, 8
        %s422 = scalar_lea.vmem [#allocation2], %s421
        %s423 = sand.u32 %s147, 1
        %s424 = scalar_lea.sflag [#allocation5], %s423
        %s425 = sand.u32 %s147, 1
        %s426 = smul.addr %s425, 8
        %s427 = scalar_lea.vmem [#allocation4], %s426
        // Predicated region
        $region33: #{dot_product_attention.1} parent=31 // pred_check
          %p428 = pneg %p129
        $region34: #{dot_product_attention.1} parent=31 // pred_check_branch
          %430 = sbr.rel (%p428) target = $region36
        $region35: #{dot_product_attention.1} parent=31 // pred_region
          %s432 = ssub.s32 128, 128
          %433 = vsyncadd %s419, %s432
          %s434 = sadd.s32 %s27, %s26
          %s435 = smul.addr %s434, 128
          %s436 = scalar_lea.hbm %s3, %s435
          %s438 = sshll.u32 %s422, 4
          %s439 = int_to_ptr.vmem [resolvable:$true] %s438
          %441 = dma.vmem_to_hbm [thread:$0]  %s439, 128, %s436, %s419
        $region36: #{dot_product_attention.1} parent=31 // pred_fallthru
          _
        // Predicated region
        $region37: #{dot_product_attention.1} parent=31 // pred_check
          %p442 = pneg %p157
        $region38: #{dot_product_attention.1} parent=31 // pred_check_branch
          %444 = sbr.rel (%p442) target = $region40
        $region39: #{dot_product_attention.1} parent=31 // pred_region
          %s446 = ssub.s32 128, 128
          %447 = vsyncadd %s424, %s446
          %s448 = sadd.s32 %s27, %s26
          %s449 = smul.addr %s448, 128
          %s450 = scalar_lea.hbm %s4, %s449
          %s452 = sshll.u32 %s427, 4
          %s453 = int_to_ptr.vmem [resolvable:$true] %s452
          %455 = dma.vmem_to_hbm [thread:$0]  %s453, 128, %s450, %s424
        $region40: #{dot_product_attention.1} parent=31 // pred_fallthru
          _
      $region32: #{dot_product_attention.1} parent=5 // pred_fallthru
        _
      %p456 = scmp.le.s32.totalorder 2, %s17
      // Predicated region
      $region41: #{dot_product_attention.1} parent=5 // pred_check
        %p457 = pneg %p456
      $region42: #{dot_product_attention.1} parent=5 // pred_check_branch
        %459 = sbr.rel (%p457) target = $region44
      $region43: #{dot_product_attention.1} parent=5 // pred_region
        %s460 = ssub.s32 %s17, 2
        // Predicated region
        $region45: #{dot_product_attention.1} parent=43 // pred_check
          %p461 = pneg %p135
        $region46: #{dot_product_attention.1} parent=43 // pred_check_branch
          %463 = sbr.rel (%p461) target = $region48
        $region47: #{dot_product_attention.1} parent=43 // pred_region
          %s464 = sand.u32 %s120, 1
          %s465 = scalar_lea.sflag [#allocation3], %s464
          %s466 = sand.u32 %s120, 1
          %s467 = smul.addr %s466, 8
          %s468 = scalar_lea.vmem [#allocation2], %s467
          %469 = dma.done %s465, 128
        $region48: #{dot_product_attention.1} parent=43 // pred_fallthru
          _
        // Predicated region
        $region49: #{dot_product_attention.1} parent=43 // pred_check
          %p470 = pneg %p163
        $region50: #{dot_product_attention.1} parent=43 // pred_check_branch
          %472 = sbr.rel (%p470) target = $region52
        $region51: #{dot_product_attention.1} parent=43 // pred_region
          %s473 = sand.u32 %s148, 1
          %s474 = scalar_lea.sflag [#allocation5], %s473
          %s475 = sand.u32 %s148, 1
          %s476 = smul.addr %s475, 8
          %s477 = scalar_lea.vmem [#allocation4], %s476
          %478 = dma.done %s474, 128
        $region52: #{dot_product_attention.1} parent=43 // pred_fallthru
          _
      $region44: #{dot_product_attention.1} parent=5 // pred_fallthru
        _
    $region6: #{dot_product_attention.1} parent=1 // loop_footer
      %s21 = sadd.s32 1, %s17
    $region7: #{dot_product_attention.1} parent=1 // loop_footer_branch
      %16 = sbr.rel target = $region3
    $region8: #{dot_product_attention.1} parent=1 // loop_exit
      _
    %479 = vsyncpa [#allocation3], 1
    %s480 = scalar_lea.sflag [#allocation3], 1
    %481 = vsyncpa %s480, 1
    %482 = vsyncpa [#allocation5], 1
    %s483 = scalar_lea.sflag [#allocation5], 1
    %484 = vsyncpa %s483, 1

</llo_original>
